<compile_context>
chip_gen: v5e
topology: v5e:2x2
jax: 0.10.0
libtpu: 0.0.40
codegen_flags: <defaults>
</compile_context>

<pallas_src>
import functools

import jax
import jax.numpy as jnp
from jax.experimental import pallas as pl
from jax.experimental.pallas import tpu as pltpu

EPS = 1e-5
LANE = 128
_VMEM = pl.BlockSpec(memory_space=pltpu.MemorySpace.VMEM)


def _round_up(n, m):
    return (n + m - 1) // m * m


# ----------------------------------------------------------------------------
# One-time probe: pin down pltpu.roll's rotate direction so the stencil shifts
# are correct regardless of convention.  Returns s such that
#   pltpu.roll(x, (s*o) % M, axis=1)[j] == x[(j + o) % M].
# ----------------------------------------------------------------------------
@functools.lru_cache(maxsize=None)
def _roll_sign() -> int:
    def probe(x_ref, o_ref):
        o_ref[...] = pltpu.roll(x_ref[...], 1, axis=1)

    x = jnp.broadcast_to(jnp.arange(LANE, dtype=jnp.float32), (8, LANE))
    r = pl.pallas_call(
        probe,
        out_shape=jax.ShapeDtypeStruct((8, LANE), jnp.float32),
        in_specs=[_VMEM], out_specs=_VMEM,
    )(x)
    # jnp.roll-like convention puts x[..., -1] (=127) at lane 0.
    return -1 if float(r[0, 0]) > 1.5 else 1


# ----------------------------------------------------------------------------
# In-kernel helpers (traced inside the Pallas kernel body)
# ----------------------------------------------------------------------------
def _shift(x, offset, roll_sign):
    """x[(j + offset) % M] along lanes via an XLU lane rotation (no copies)."""
    if offset == 0:
        return x
    m = x.shape[-1]
    return pltpu.roll(x, (roll_sign * offset) % m, axis=1)


def _conv3x3(x, w_ref, *, wp, roll_sign):
    """Centered 3x3 stencil on the flattened canvas.

    x:     (C_in, M)  canvas-flat activations (zero ring per image, zero pads)
    w_ref: (9, C_out, C_in) tap-major (kh*3+kw) weight taps
    Nine per-tap MXU matmuls accumulated in f32 — no patch-matrix slab.
    Only interior positions of the result are valid (caller masks).
    """
    acc = None
    for a in (-1, 0, 1):            # row offset
        for b in (-1, 0, 1):        # col offset
            t = (a + 1) * 3 + (b + 1)
            xs = _shift(x, a * wp + b, roll_sign)
            p = jnp.dot(w_ref[t], xs, preferred_element_type=jnp.float32)
            acc = p if acc is None else acc + p
    return acc


def _bn_params(ref):
    p = ref[...]                    # (C, 2) = [gamma | beta]
    return p[:, 0:1], p[:, 1:2]


def _bn_train(y, mask, count, gamma, beta, *, relu, remask):
    """Training-mode BatchNorm with masked (interior-only) statistics, in f32."""
    ym = y * mask
    s1 = jnp.sum(ym, axis=1, keepdims=True)          # (C, 1)
    s2 = jnp.sum(ym * ym, axis=1, keepdims=True)     # (C, 1)
    inv_n = 1.0 / count
    mean = s1 * inv_n
    var = s2 * inv_n - mean * mean                   # biased variance (PyTorch)
    out = (y - mean) * (jax.lax.rsqrt(var + EPS) * gamma) + beta
    if relu:
        out = jnp.maximum(out, 0.0)
    if remask:
        out = out * mask                             # restore exact zero ring
    return out


# ----------------------------------------------------------------------------
# The fused kernel
# ----------------------------------------------------------------------------
def _fused_kernel(fine_ref, up_ref, mask_up_ref, mask_all_ref,
                  w_up_ref, bn_up_ref,
                  w1a_ref, bn1a_ref, w1s_ref, bn1s_ref, w1b_ref, bn1b_ref,
                  w2a_ref, bn2a_ref, w2s_ref, bn2s_ref, w2b_ref, bn2b_ref,
                  out_ref, *, wp, m_fine_pad, cnt_up, cnt_all, roll_sign):
    mask_up = mask_up_ref[...]                       # (1, M_up)
    mask_all = mask_all_ref[...]                     # (1, M_all)

    # --- upsample: ConvTranspose2d(k=3, stride=(1,2)) as a centered stencil on
    #     the zero-dilated canvas (flipped kernel), fused with BN + ReLU.
    #     ConvTranspose bias dropped: cancelled exactly by BN mean subtraction.
    g, b = _bn_params(bn_up_ref)
    x_up = _conv3x3(up_ref[...], w_up_ref, wp=wp, roll_sign=roll_sign)
    x_up = _bn_train(x_up, mask_up, cnt_up, g, b, relu=True, remask=True)

    # --- batch concat WITHOUT an in-kernel lane concat: fine canvas and x_up
    #     are written side by side into the lane-dense, 128-aligned output
    #     canvas, which doubles as the working buffer for the resblocks.
    # TODO(synk): `nn.concat` does not exist in PyTorch; interpreted as
    #     torch.cat(dim=0) (batch concat) = concat along the flat canvas axis.
    out_ref[:, :m_fine_pad] = fine_ref[...]
    out_ref[:, m_fine_pad:] = x_up
    y = out_ref[...]                                 # (C, M_all)

    # --- two ResnetBlocks
    for wa_ref, bna_ref, ws_ref, bns_ref, wb_ref, bnb_ref in (
            (w1a_ref, bn1a_ref, w1s_ref, bn1s_ref, w1b_ref, bn1b_ref),
            (w2a_ref, bn2a_ref, w2s_ref, bn2s_ref, w2b_ref, bn2b_ref)):
        # 1x1 skip path (center tap only, no shift) + BN (no re-mask needed)
        gs, bs = _bn_params(bns_ref)
        idn = jnp.dot(ws_ref[...], y, preferred_element_type=jnp.float32)
        idn = _bn_train(idn, mask_all, cnt_all, gs, bs, relu=False, remask=False)
        # main path: conv3x3 -> BN -> ReLU (re-mask: feeds conv2) -> conv3x3 -> BN
        g1, b1 = _bn_params(bna_ref)
        h = _conv3x3(y, wa_ref, wp=wp, roll_sign=roll_sign)
        h = _bn_train(h, mask_all, cnt_all, g1, b1, relu=True, remask=True)
        g2, b2 = _bn_params(bnb_ref)
        h2 = _conv3x3(h, wb_ref, wp=wp, roll_sign=roll_sign)
        h2 = _bn_train(h2, mask_all, cnt_all, g2, b2, relu=False, remask=False)
        # fused residual add + ReLU; one mask restores the zero ring for the
        # next conv input.
        y = jnp.maximum(h2 + idn, 0.0) * mask_all

    out_ref[...] = y


# ----------------------------------------------------------------------------
# One-time weight re-layout (hoisted out of the jitted forward)
# ----------------------------------------------------------------------------
def _conv_taps(w):                 # Conv2d (Cout, Cin, 3, 3) -> (9, Cout, Cin)
    co, ci = w.shape[0], w.shape[1]
    return jnp.transpose(w, (2, 3, 0, 1)).reshape(9, co, ci).astype(jnp.float32)


def _convT_taps(w_t, cin_pad):     # ConvTranspose2d (Cin, Cout, 3, 3) -> conv taps
    ci, co = w_t.shape[0], w_t.shape[1]
    wf = jnp.flip(w_t, axis=(2, 3))
    taps = jnp.transpose(wf, (2, 3, 1, 0)).reshape(9, co, ci)
    if cin_pad > ci:
        taps = jnp.pad(taps, ((0, 0), (0, 0), (0, cin_pad - ci)))
    return taps.astype(jnp.float32)


def _bn_pack(gamma, beta):         # (C,), (C,) -> (C, 2)
    return jnp.stack([gamma, beta], axis=1).astype(jnp.float32)


def prepare_params(params):
    """PyTorch-layout params -> kernel-ready tap matrices. Call once, outside jit."""
    cin = params["up_w"].shape[0]
    cin_pad = _round_up(cin, 8)

    def block(p):
        return {
            "w_a": _conv_taps(p["w1"]),
            "bn1": _bn_pack(p["gamma1"], p["beta1"]),
            "w_s": p["skip_w"][:, :, 0, 0].astype(jnp.float32),
            "bns": _bn_pack(p["skip_gamma"], p["skip_beta"]),
            "w_b": _conv_taps(p["w2"]),
            "bn2": _bn_pack(p["gamma2"], p["beta2"]),
        }

    return {
        # "up_b" intentionally unused: training-mode BN mean subtraction
        # cancels the ConvTranspose bias exactly in the forward output.
        "w_up": _convT_taps(params["up_w"], cin_pad),
        "bn_up": _bn_pack(params["bn_gamma"], params["bn_beta"]),
        "block1": block(params["block1"]),
        "block2": block(params["block2"]),
    }


# ----------------------------------------------------------------------------
# Jitted forward (PyTorch-style NCHW in / NCHW out)
# ----------------------------------------------------------------------------
@functools.partial(jax.jit, static_argnames=("roll_sign",))
def feature_aggregator(fine_nchw, coarse_nchw, prep, *, roll_sign):
    fine = fine_nchw.astype(jnp.float32)
    coarse = coarse_nchw.astype(jnp.float32)
    bf, cf, ho, wo = fine.shape
    bc, cin, h, w = coarse.shape
    # ConvTranspose2d(k=3, stride=(1,2)) output must match fine_input spatially.
    assert ho == h + 2 and wo == 2 * w + 1, (fine.shape, coarse.shape)

    cin_pad = _round_up(cin, 8)
    hp, wp = ho + 2, wo + 2                 # canvas = output + 1-pixel zero ring
    img = hp * wp
    m_fine, m_up = bf * img, bc * img
    m_fine_pad = _round_up(m_fine, LANE)    # 128-aligned regions -> unmasked vst
    m_up_pad = _round_up(m_up, LANE)
    m_all_pad = m_fine_pad + m_up_pad

    # fine canvas: channels -> sublanes, flattened batch*spatial -> lanes.
    fine_cv = jnp.zeros((cf, bf, hp, wp), jnp.float32)
    fine_cv = fine_cv.at[:, :, 1:1 + ho, 1:1 + wo].set(jnp.transpose(fine, (1, 0, 2, 3)))
    fine_cv = jnp.pad(fine_cv.reshape(cf, m_fine), ((0, 0), (0, m_fine_pad - m_fine)))

    # coarse: zero-dilated along W (stride_w = 2) + full (k-1)=2 padding, placed
    # directly on a same-sized canvas (ConvTranspose -> plain conv).
    up_cv = jnp.zeros((cin_pad, bc, hp, wp), jnp.float32)
    up_cv = up_cv.at[:cin, :, 2:2 + h, 2:2 + 2 * w:2].set(jnp.transpose(coarse, (1, 0, 2, 3)))
    up_cv = jnp.pad(up_cv.reshape(cin_pad, m_up), ((0, 0), (0, m_up_pad - m_up)))

    # interior masks (static data; built once in the wrapper, not in the kernel)
    img_mask = jnp.zeros((hp, wp), jnp.float32).at[1:1 + ho, 1:1 + wo].set(1.0)
    img_mask = img_mask.reshape(1, img)
    mask_fine = jnp.pad(jnp.tile(img_mask, (1, bf)), ((0, 0), (0, m_fine_pad - m_fine)))
    mask_up = jnp.pad(jnp.tile(img_mask, (1, bc)), ((0, 0), (0, m_up_pad - m_up)))
    mask_all = jnp.concatenate([mask_fine, mask_up], axis=1)

    kernel = functools.partial(
        _fused_kernel, wp=wp, m_fine_pad=m_fine_pad,
        cnt_up=float(bc * ho * wo), cnt_all=float((bf + bc) * ho * wo),
        roll_sign=roll_sign)

    b1, b2 = prep["block1"], prep["block2"]
    inputs = (fine_cv, up_cv, mask_up, mask_all,
              prep["w_up"], prep["bn_up"],
              b1["w_a"], b1["bn1"], b1["w_s"], b1["bns"], b1["w_b"], b1["bn2"],
              b2["w_a"], b2["bn1"], b2["w_s"], b2["bns"], b2["w_b"], b2["bn2"])

    out_canvas = pl.pallas_call(
        kernel,
        out_shape=jax.ShapeDtypeStruct((cf, m_all_pad), jnp.float32),  # lane-dense
        in_specs=[_VMEM] * len(inputs),
        out_specs=_VMEM,
    )(*inputs)

    # TODO(synk): at production canvas sizes, fuse this crop + NCHW transpose
    # (and the scatter above) into the kernel / neighboring ops instead of
    # separate XLA relayout passes, and grid the kernel with two-pass BN stats.
    fine_part = out_canvas[:, :m_fine].reshape(cf, bf, hp, wp)
    up_part = out_canvas[:, m_fine_pad:m_fine_pad + m_up].reshape(cf, bc, hp, wp)
    out = jnp.concatenate([fine_part, up_part], axis=1)[:, :, 1:1 + ho, 1:1 + wo]
    return jnp.transpose(out, (1, 0, 2, 3))             # NCHW (bf+bc, C, Ho, Wo)


# ----------------------------------------------------------------------------
# Pure-JAX reference (for correctness check)
# ----------------------------------------------------------------------------
def _conv_ref(x, w, padding, lhs_dilation=(1, 1)):
    return jax.lax.conv_general_dilated(
        x, w, window_strides=(1, 1), padding=padding, lhs_dilation=lhs_dilation,
        dimension_numbers=("NCHW", "OIHW", "NCHW"),
        precision=jax.lax.Precision.HIGHEST)


def _bn_ref(x, gamma, beta):
    mean = jnp.mean(x, axis=(0, 2, 3), keepdims=True)
    var = jnp.mean((x - mean) ** 2, axis=(0, 2, 3), keepdims=True)
    return ((x - mean) / jnp.sqrt(var + EPS)) * gamma.reshape(1, -1, 1, 1) \
        + beta.reshape(1, -1, 1, 1)


def _block_ref(x, p):
    idn = _bn_ref(_conv_ref(x, p["skip_w"], [(0, 0), (0, 0)]),
                  p["skip_gamma"], p["skip_beta"])
    h = jax.nn.relu(_bn_ref(_conv_ref(x, p["w1"], [(1, 1), (1, 1)]), p["gamma1"], p["beta1"]))
    h = _bn_ref(_conv_ref(h, p["w2"], [(1, 1), (1, 1)]), p["gamma2"], p["beta2"])
    return jax.nn.relu(h + idn)


def feature_aggregator_ref(fine, coarse, params):
    w_eq = jnp.transpose(jnp.flip(params["up_w"], axis=(2, 3)), (1, 0, 2, 3))
    x = _conv_ref(coarse, w_eq, [(2, 2), (2, 2)], lhs_dilation=(1, 2))
    x = x + params["up_b"].reshape(1, -1, 1, 1)
    x = jax.nn.relu(_bn_ref(x, params["bn_gamma"], params["bn_beta"]))
    y = jnp.concatenate([fine, x], axis=0)
    y = _block_ref(y, params["block1"])
    return _block_ref(y, params["block2"])


# ----------------------------------------------------------------------------
# Deterministic parameter construction (PyTorch layouts)
# ----------------------------------------------------------------------------
def make_block_params(key, c):
    ks = jax.random.split(key, 8)
    return {
        "w1": 0.1 * jax.random.normal(ks[0], (c, c, 3, 3), jnp.float32),
        "gamma1": 1.0 + 0.1 * jax.random.normal(ks[1], (c,), jnp.float32),
        "beta1": 0.1 * jax.random.normal(ks[2], (c,), jnp.float32),
        "w2": 0.1 * jax.random.normal(ks[3], (c, c, 3, 3), jnp.float32),
        "gamma2": 1.0 + 0.1 * jax.random.normal(ks[4], (c,), jnp.float32),
        "beta2": 0.1 * jax.random.normal(ks[5], (c,), jnp.float32),
        "skip_w": 0.1 * jax.random.normal(ks[6], (c, c, 1, 1), jnp.float32),
        "skip_gamma": 1.0 + 0.1 * jax.random.normal(ks[7], (c,), jnp.float32),
        "skip_beta": jnp.zeros((c,), jnp.float32),
    }


def make_params(key, input_channels, num_filters):
    ks = jax.random.split(key, 6)
    return {
        "up_w": 0.1 * jax.random.normal(ks[0], (input_channels, num_filters, 3, 3),
                                        jnp.float32),
        "up_b": 0.1 * jax.random.normal(ks[1], (num_filters,), jnp.float32),
        "bn_gamma": 1.0 + 0.1 * jax.random.normal(ks[2], (num_filters,), jnp.float32),
        "bn_beta": 0.1 * jax.random.normal(ks[3], (num_filters,), jnp.float32),
        "block1": make_block_params(ks[4], num_filters),
        "block2": make_block_params(ks[5], num_filters),
    }


if __name__ == "__main__":
    input_channels = 4   # channels of coarse_input
    num_filters = 8
    B, H, W = 2, 6, 7    # coarse spatial; upsample -> (H+2, 2W+1) = (8, 15)

    key = jax.random.PRNGKey(0)
    k_par, k_fine, k_coarse = jax.random.split(key, 3)

    params = make_params(k_par, input_channels, num_filters)
    prep = prepare_params(params)        # one-time weight re-layout, outside jit

    fine_input = jax.random.normal(k_fine, (B, num_filters, H + 2, 2 * W + 1),
                                   jnp.float32)
    coarse_input = jax.random.normal(k_coarse, (B, input_channels, H, W), jnp.float32)

    sign = _roll_sign()                  # one-time pltpu.roll direction probe
    out = feature_aggregator(fine_input, coarse_input, prep, roll_sign=sign)
    out = jax.block_until_ready(out)
    assert out.shape == (2 * B, num_filters, H + 2, 2 * W + 1), out.shape
    assert bool(jnp.all(jnp.isfinite(out)))

    ref = feature_aggregator_ref(fine_input, coarse_input, params)
    err = float(jnp.max(jnp.abs(out - ref)))
    assert err < 5e-3, err

    print("KERNEL_OK")
</pallas_src>

<mosaic_0001>
module attributes {stable_mosaic.version = 11 : i64} {
  func.func @probe(%arg0: memref<8x128xf32, #tpu.memory_space<vmem>>, %arg1: memref<8x128xf32, #tpu.memory_space<vmem>>) attributes {dimension_semantics = [], scalar_prefetch = 0 : i64, scratch_operands = 0 : i64, tpu.core_type = #tpu.core_type<tc>} {
    %c0 = arith.constant 0 : index
    %c0_0 = arith.constant 0 : index
    %0 = vector.load %arg0[%c0, %c0_0] : memref<8x128xf32, #tpu.memory_space<vmem>>, vector<8x128xf32>
    %c1_i32 = arith.constant 1 : i32
    %1 = tpu.dynamic_rotate %0 by %c1_i32 dim 1 : vector<8x128xf32>, i32 -> vector<8x128xf32>
    %c0_1 = arith.constant 0 : index
    %c0_2 = arith.constant 0 : index
    %2 = vector.load %arg1[%c0_1, %c0_2] : memref<8x128xf32, #tpu.memory_space<vmem>>, vector<8x128xf32>
    tpu.vector_store %arg1[%c0_1, %c0_2], %1 {strides = array<i32>} : memref<8x128xf32, #tpu.memory_space<vmem>>, vector<8x128xf32>,
    return
  }
}

</mosaic_0001>

<llo_original>
// kernel: tpu_custom_call.1
$region0: #{tpu_custom_call.1}
  #allocation0 [shape = 'u32[]', space=smem, size = 0x4, offset = 0x4, fixed_abs, tag = 'smem constant byte address 0x4 - core index']
  #allocation1 [shape = 'u32[72,128]{1,0:T(1,128)}', space=vmem, size = 0x9000, scoped, tag = 'internal scratch']
  %s0 = inlined_call_operand.hbm [shape: f32[8,128], index: 0, kind: input, shape index: {}]
  %s1 = inlined_call_operand.hbm [shape: f32[8,128], index: 1, kind: output, shape index: {}]
  %s2 = sld [smem:[#allocation0]]
  $region18: #{tpu_custom_call.1} parent=0
    _
  %s4 = ssub.s32 1, %s2
  %s5 = scalar_select 0, %s4, %s2
  $region1: #{tpu_custom_call.1} parent=0
    #allocation2 [shape = 'u8[4096]{0}', space=vmem, size = 0x1000, scoped, tag = 'input window, operand 0, single buffered']
    #allocation3 [shape = 's32[1]{0}', space=sflag, size = 0x4, scoped, tag = 'scoped memory for tpu_custom_call.1']
    #allocation4 [shape = 's32[1]{0}', space=sflag, size = 0x4, scoped, tag = 'scoped memory for tpu_custom_call.1']
    #allocation5 [shape = 'u8[4096]{0}', space=vmem, size = 0x1000, scoped, tag = 'output window, operand 0, single buffered']
    %6 = vsyncpa [#allocation3], 0
    %7 = vsyncpa [#allocation4], 0
    // Predicated region
    $region2: #{tpu_custom_call.1} parent=1 // pred_check
      _
    $region3: #{tpu_custom_call.1} parent=1 // pred_check_branch
      %9 = sbr.rel (0) target = $region5
    $region4: #{tpu_custom_call.1} parent=1 // pred_region
      %11 = vsyncadd [#allocation3], 0
      %s13 = sshll.u32 %s0, 4
      %s14 = int_to_ptr.hbm [resolvable:$true] %s13
      %s15 = sshll.u32 [#allocation2], 4
      %s16 = int_to_ptr.vmem [resolvable:$true] %s15
      %18 = dma.hbm_to_vmem [thread:$0]  %s14, 128, %s16, [#allocation3]
    $region5: #{tpu_custom_call.1} parent=1 // pred_fallthru
      _
    // Predicated region
    $region6: #{tpu_custom_call.1} parent=1 // pred_check
      _
    $region7: #{tpu_custom_call.1} parent=1 // pred_check_branch
      %20 = sbr.rel (0) target = $region9
    $region8: #{tpu_custom_call.1} parent=1 // pred_region
      %22 = dma.done [#allocation3], 128
    $region9: #{tpu_custom_call.1} parent=1 // pred_fallthru
      _
    %v23 = vld [vmem:[#allocation2] sm:$0xff]
    %24 = vrot.lane.b32.xlu0 %v23, 1
    %v25 = vpop.permute.xlu0 %24
    %26 = vst [vmem:[#allocation5] sm:$0xff] %v25
    // Predicated region
    $region10: #{tpu_custom_call.1} parent=1 // pred_check
      _
    $region11: #{tpu_custom_call.1} parent=1 // pred_check_branch
      %28 = sbr.rel (0) target = $region13
    $region12: #{tpu_custom_call.1} parent=1 // pred_region
      %30 = vsyncadd [#allocation4], 0
      %s32 = sshll.u32 [#allocation5], 4
      %s33 = int_to_ptr.vmem [resolvable:$true] %s32
      %s34 = sshll.u32 %s1, 4
      %s35 = int_to_ptr.hbm [resolvable:$true] %s34
      %37 = dma.vmem_to_hbm [thread:$0]  %s33, 128, %s35, [#allocation4]
    $region13: #{tpu_custom_call.1} parent=1 // pred_fallthru
      _
    // Predicated region
    $region14: #{tpu_custom_call.1} parent=1 // pred_check
      _
    $region15: #{tpu_custom_call.1} parent=1 // pred_check_branch
      %39 = sbr.rel (0) target = $region17
    $region16: #{tpu_custom_call.1} parent=1 // pred_region
      %41 = dma.done [#allocation4], 128
    $region17: #{tpu_custom_call.1} parent=1 // pred_fallthru
      _
    %42 = vsyncpa [#allocation3], 1
    %43 = vsyncpa [#allocation4], 1

</llo_original>
